<compile_context>
chip_gen: v7x
topology: tpu7x:2x2x1
jax: 0.10.0
libtpu: 0.0.40
codegen_flags: <defaults>
</compile_context>

<pallas_src>
import functools

import jax
import jax.numpy as jnp
from jax.experimental import pallas as pl
from jax.experimental.pallas import tpu as pltpu


IN_FEATURES = 2
OUT_FEATURES = 2


def _linear_t_kernel(w_ref, b_ref, xt_ref, yt_ref):
    """One (2, TB) tile of y^T = W @ x^T + b.

    w_ref:  (2, 2) f32 in SMEM, PyTorch layout weight[out, in].
    b_ref:  (2,)   f32 in SMEM.
    xt_ref: (2, TB) f32 in VMEM (x transposed; batch on the lane axis).
    yt_ref: (2, TB) f32 in VMEM.
    """
    # Scalar weight / bias reads from SMEM -- hoisted once per block.
    w00 = w_ref[0, 0]
    w01 = w_ref[0, 1]
    w10 = w_ref[1, 0]
    w11 = w_ref[1, 1]
    b0 = b_ref[0]
    b1 = b_ref[1]

    x0 = xt_ref[0:1, :]                       # (1, TB) lane-dense row
    x1 = xt_ref[1:2, :]

    # Two VPU FMAs per output row; no MXU involvement at all.
    yt_ref[0:1, :] = x0 * w00 + x1 * w01 + b0
    yt_ref[1:2, :] = x0 * w10 + x1 * w11 + b1


@functools.partial(jax.jit, static_argnames=("tb",))
def simple_model_forward(x, weight, bias, *, tb=128):
    """y = x @ weight.T + bias, matching torch.nn.Linear(2, 2).

    Args:
      x:      (B, 2) float32
      weight: (2, 2) float32, PyTorch layout (out_features, in_features)
      bias:   (2,)   float32
      tb:     batch tile (lane) width, multiple of 128.  128 is right for
              small/demo batches; for production-sized batches raise this to
              the 8K-64K range (bigger tiles amortize the ~0.35us/step grid
              overhead while staying far inside the scoped VMEM limit).
    Returns:
      (B, 2) float32
    """
    B, in_f = x.shape
    out_f, in_f_w = weight.shape
    assert in_f == IN_FEATURES and in_f_w == IN_FEATURES and out_f == OUT_FEATURES
    assert tb % 128 == 0

    # Wrapper-side layout plumbing: present lane-dense (batch-minor) blocks.
    xt = x.T                                  # (2, B)
    pad_b = pl.cdiv(B, tb) * tb
    if pad_b != B:
        xt = jnp.pad(xt, ((0, 0), (0, pad_b - B)))

    yt = pl.pallas_call(
        _linear_t_kernel,
        out_shape=jax.ShapeDtypeStruct((out_f, pad_b), x.dtype),
        grid_spec=pl.GridSpec(
            grid=(pad_b // tb,),
            in_specs=[
                pl.BlockSpec(memory_space=pltpu.MemorySpace.SMEM),   # weight
                pl.BlockSpec(memory_space=pltpu.MemorySpace.SMEM),   # bias
                pl.BlockSpec((in_f, tb), lambda i: (0, i)),          # x^T tile
            ],
            out_specs=pl.BlockSpec((out_f, tb), lambda i: (0, i)),   # y^T tile
        ),
        compiler_params=pltpu.CompilerParams(
            # Independent batch tiles: "parallel" lets v7x shard the grid over
            # its 2 TensorCores; neutral on single-TC v5e/v6e.
            dimension_semantics=("parallel",),
        ),
    )(weight, bias, xt)

    return yt[:, :B].T


if __name__ == "__main__":
    key = jax.random.PRNGKey(0)
    kx, kw, kb, kx2 = jax.random.split(key, 4)

    # Small shapes consistent with SimpleModel: (batch, 2) -> (batch, 2).
    B, IN, OUT = 8, IN_FEATURES, OUT_FEATURES

    # Deterministic parameter init (mimics torch.nn.Linear default:
    # uniform(-1/sqrt(in_features), 1/sqrt(in_features))).
    bound = 1.0 / float(IN) ** 0.5
    weight = jax.random.uniform(kw, (OUT, IN), jnp.float32, -bound, bound)
    bias = jax.random.uniform(kb, (OUT,), jnp.float32, -bound, bound)

    x = jax.random.normal(kx, (B, IN), jnp.float32)

    # Pallas path (pads the 8-row batch to one 128-lane tile).
    y = simple_model_forward(x, weight, bias)
    jax.block_until_ready(y)

    y_ref = x @ weight.T + bias
    assert y.shape == (B, OUT)
    assert jnp.allclose(y, y_ref, atol=1e-5, rtol=1e-5)

    # Also exercise a multi-tile batch that is NOT a multiple of the tile width.
    B2 = 300
    x2 = jax.random.normal(kx2, (B2, IN), jnp.float32)
    y2 = simple_model_forward(x2, weight, bias)
    jax.block_until_ready(y2)
    assert y2.shape == (B2, OUT)
    assert jnp.allclose(y2, x2 @ weight.T + bias, atol=1e-5, rtol=1e-5)

    print("KERNEL_OK")
</pallas_src>

<mosaic_0001>
module attributes {stable_mosaic.version = 11 : i64} {
  func.func @_linear_t_kernel(%arg0: i32, %arg1: memref<2x2xf32, #tpu.memory_space<smem>>, %arg2: memref<2xf32, #tpu.memory_space<smem>>, %arg3: memref<2x128xf32, #tpu.memory_space<vmem>>, %arg4: memref<2x128xf32, #tpu.memory_space<vmem>>) attributes {dimension_semantics = [#tpu.dimension_semantics<parallel>], iteration_bounds = array<i64: 1>, scalar_prefetch = 0 : i64, scratch_operands = 0 : i64, tpu.core_type = #tpu.core_type<tc>, window_params = [{transform_indices = @transform_0, window_bounds = array<i64: 2, 2>}, {transform_indices = @transform_1, window_bounds = array<i64: 2>}, {transform_indices = @transform_2, window_bounds = array<i64: 2, 128>}, {transform_indices = @transform_3, window_bounds = array<i64: 2, 128>}]} {
    %c0 = arith.constant 0 : index
    %c0_0 = arith.constant 0 : index
    %0 = memref.load %arg1[%c0, %c0_0] : memref<2x2xf32, #tpu.memory_space<smem>>
    %c0_1 = arith.constant 0 : index
    %c1 = arith.constant 1 : index
    %1 = memref.load %arg1[%c0_1, %c1] : memref<2x2xf32, #tpu.memory_space<smem>>
    %c1_2 = arith.constant 1 : index
    %c0_3 = arith.constant 0 : index
    %2 = memref.load %arg1[%c1_2, %c0_3] : memref<2x2xf32, #tpu.memory_space<smem>>
    %c1_4 = arith.constant 1 : index
    %c1_5 = arith.constant 1 : index
    %3 = memref.load %arg1[%c1_4, %c1_5] : memref<2x2xf32, #tpu.memory_space<smem>>
    %c0_6 = arith.constant 0 : index
    %4 = memref.load %arg2[%c0_6] : memref<2xf32, #tpu.memory_space<smem>>
    %c1_7 = arith.constant 1 : index
    %5 = memref.load %arg2[%c1_7] : memref<2xf32, #tpu.memory_space<smem>>
    %c0_8 = arith.constant 0 : index
    %c0_9 = arith.constant 0 : index
    %6 = vector.load %arg3[%c0_8, %c0_9] : memref<2x128xf32, #tpu.memory_space<vmem>>, vector<1x128xf32>
    %c1_10 = arith.constant 1 : index
    %c0_11 = arith.constant 0 : index
    %7 = vector.load %arg3[%c1_10, %c0_11] : memref<2x128xf32, #tpu.memory_space<vmem>>, vector<1x128xf32>
    %8 = vector.broadcast %0 : f32 to vector<1x128xf32>
    %9 = arith.mulf %6, %8 : vector<1x128xf32>
    %10 = vector.broadcast %1 : f32 to vector<1x128xf32>
    %11 = arith.mulf %7, %10 : vector<1x128xf32>
    %12 = arith.addf %9, %11 : vector<1x128xf32>
    %13 = vector.broadcast %4 : f32 to vector<1x128xf32>
    %14 = arith.addf %12, %13 : vector<1x128xf32>
    %c0_12 = arith.constant 0 : index
    %c0_13 = arith.constant 0 : index
    %15 = vector.load %arg4[%c0_12, %c0_13] : memref<2x128xf32, #tpu.memory_space<vmem>>, vector<1x128xf32>
    tpu.vector_store %arg4[%c0_12, %c0_13], %14 {strides = array<i32>} : memref<2x128xf32, #tpu.memory_space<vmem>>, vector<1x128xf32>,
    %16 = vector.broadcast %2 : f32 to vector<1x128xf32>
    %17 = arith.mulf %6, %16 : vector<1x128xf32>
    %18 = vector.broadcast %3 : f32 to vector<1x128xf32>
    %19 = arith.mulf %7, %18 : vector<1x128xf32>
    %20 = arith.addf %17, %19 : vector<1x128xf32>
    %21 = vector.broadcast %5 : f32 to vector<1x128xf32>
    %22 = arith.addf %20, %21 : vector<1x128xf32>
    %c1_14 = arith.constant 1 : index
    %c0_15 = arith.constant 0 : index
    %23 = vector.load %arg4[%c1_14, %c0_15] : memref<2x128xf32, #tpu.memory_space<vmem>>, vector<1x128xf32>
    tpu.vector_store %arg4[%c1_14, %c0_15], %22 {strides = array<i32>} : memref<2x128xf32, #tpu.memory_space<vmem>>, vector<1x128xf32>,
    return
  }
  func.func @transform_0(%arg0: i32) -> (i32, i32) {
    %c0_i32 = arith.constant 0 : i32
    %c0_i32_0 = arith.constant 0 : i32
    %c0_i32_1 = arith.constant 0 : i32
    return %c0_i32, %c0_i32_0 : i32, i32
  }
  func.func @transform_1(%arg0: i32) -> i32 {
    %c0_i32 = arith.constant 0 : i32
    %c0_i32_0 = arith.constant 0 : i32
    return %c0_i32 : i32
  }
  func.func @transform_2(%arg0: i32) -> (i32, i32) {
    %c0_i32 = arith.constant 0 : i32
    %c0_i32_0 = arith.constant 0 : i32
    return %c0_i32, %arg0 : i32, i32
  }
  func.func @transform_3(%arg0: i32) -> (i32, i32) {
    %c0_i32 = arith.constant 0 : i32
    %c0_i32_0 = arith.constant 0 : i32
    return %c0_i32, %arg0 : i32, i32
  }
}

</mosaic_0001>

<llo_original>
// kernel: simple_model_forward.1
$region0: #{simple_model_forward.1}
  #allocation0 [shape = 'u32[]', space=smem, size = 0x4, offset = 0x4, fixed_abs, tag = 'smem constant byte address 0x4 - core index']
  #allocation1 [shape = 'u32[144,128]{1,0:T(1,128)}', space=vmem, size = 0x12000, scoped, tag = 'internal scratch']
  %s0 = inlined_call_operand.vmem [shape: f32[2,2], index: 0, kind: input, shape index: {}]
  %s1 = inlined_call_operand.vmem [shape: f32[2], index: 1, kind: input, shape index: {}]
  %s2 = inlined_call_operand.vmem [shape: f32[2,128], index: 2, kind: input, shape index: {}]
  %s3 = inlined_call_operand.vmem [shape: f32[2,128], index: 3, kind: output, shape index: {}]
  %s4 = sld [smem:[#allocation0]]
  $region30: #{simple_model_forward.1} parent=0
    _
  %s6 = ssub.s32 1, %s4
  %s7 = scalar_select 0, %s6, %s4
  $region1: #{simple_model_forward.1} parent=0
    #allocation2 [shape = 'u8[1024]{0}', space=smem, size = 0x400, scoped, tag = 'input window, operand 0, single buffered']
    #allocation3 [shape = 's32[1]{0}', space=sflag, size = 0x4, scoped, tag = 'scoped memory for simple_model_forward.1']
    #allocation4 [shape = 'u8[512]{0}', space=smem, size = 0x200, scoped, tag = 'input window, operand 1, single buffered']
    #allocation5 [shape = 's32[1]{0}', space=sflag, size = 0x4, scoped, tag = 'scoped memory for simple_model_forward.1']
    %8 = vsyncpa [#allocation3], 0
    %9 = vsyncpa [#allocation5], 0
    // Predicated region
    $region2: #{simple_model_forward.1} parent=1 // pred_check
      _
    $region3: #{simple_model_forward.1} parent=1 // pred_check_branch
      %11 = sbr.rel (0) target = $region5
    $region4: #{simple_model_forward.1} parent=1 // pred_region
      %s13 = ssub.s32 32, 32
      %14 = vsyncadd [#allocation3], %s13
      %s16 = sshll.u32 %s0, 4
      %s17 = int_to_ptr.vmem [resolvable:$true] %s16
      %19 = dma.vmem_to_smem %s17, 32, [#allocation2], [#allocation3]
    $region5: #{simple_model_forward.1} parent=1 // pred_fallthru
      _
    // Predicated region
    $region6: #{simple_model_forward.1} parent=1 // pred_check
      _
    $region7: #{simple_model_forward.1} parent=1 // pred_check_branch
      %21 = sbr.rel (0) target = $region9
    $region8: #{simple_model_forward.1} parent=1 // pred_region
      %s23 = ssub.s32 16, 16
      %24 = vsyncadd [#allocation5], %s23
      %s26 = sshll.u32 %s1, 4
      %s27 = int_to_ptr.vmem [resolvable:$true] %s26
      %29 = dma.vmem_to_smem %s27, 16, [#allocation4], [#allocation5]
    $region9: #{simple_model_forward.1} parent=1 // pred_fallthru
      _
    // Predicated region
    $region10: #{simple_model_forward.1} parent=1 // pred_check
      _
    $region11: #{simple_model_forward.1} parent=1 // pred_check_branch
      %31 = sbr.rel (0) target = $region13
    $region12: #{simple_model_forward.1} parent=1 // pred_region
      _
    $region13: #{simple_model_forward.1} parent=1 // pred_fallthru
      _
    // Predicated region
    $region14: #{simple_model_forward.1} parent=1 // pred_check
      _
    $region15: #{simple_model_forward.1} parent=1 // pred_check_branch
      %33 = sbr.rel (0) target = $region17
    $region16: #{simple_model_forward.1} parent=1 // pred_region
      %34 = dma.done [#allocation3], 32
    $region17: #{simple_model_forward.1} parent=1 // pred_fallthru
      _
    // Predicated region
    $region18: #{simple_model_forward.1} parent=1 // pred_check
      _
    $region19: #{simple_model_forward.1} parent=1 // pred_check_branch
      %36 = sbr.rel (0) target = $region21
    $region20: #{simple_model_forward.1} parent=1 // pred_region
      %37 = dma.done [#allocation5], 16
    $region21: #{simple_model_forward.1} parent=1 // pred_fallthru
      _
    %38 = sfence
    %s39 = sld [smem:[#allocation2]]
    %s40 = sld [smem:[#allocation2 + $0x1]]
    %s41 = sld [smem:[#allocation2 + $0x80]]
    %s42 = sld [smem:[#allocation2 + $0x81]]
    %s43 = sld [smem:[#allocation4]]
    %s44 = sld [smem:[#allocation4 + $0x1]]
    %v45 = vld [vmem:[%s2] sm:$0x1]
    %v46 = vld [vmem:[%s2 + $0x1] sm:$0x1]
    %v47 = vstv %s39
    %v48 = vmul.f32 %v45, %v47
    %v49 = vstv %s40
    %v50 = vmul.f32 %v46, %v49
    %v51 = vadd.f32 %v48, %v50
    %v52 = vstv %s43
    %v53 = vadd.f32 %v51, %v52
    %54 = vst [vmem:[%s3] sm:$0x1] %v53
    %v55 = vstv %s41
    %v56 = vmul.f32 %v45, %v55
    %v57 = vstv %s42
    %v58 = vmul.f32 %v46, %v57
    %v59 = vadd.f32 %v56, %v58
    %v60 = vstv %s44
    %v61 = vadd.f32 %v59, %v60
    %62 = vst [vmem:[%s3 + $0x1] sm:$0x1] %v61
    // Predicated region
    $region22: #{simple_model_forward.1} parent=1 // pred_check
      _
    $region23: #{simple_model_forward.1} parent=1 // pred_check_branch
      %64 = sbr.rel (0) target = $region25
    $region24: #{simple_model_forward.1} parent=1 // pred_region
      _
    $region25: #{simple_model_forward.1} parent=1 // pred_fallthru
      _
    // Predicated region
    $region26: #{simple_model_forward.1} parent=1 // pred_check
      _
    $region27: #{simple_model_forward.1} parent=1 // pred_check_branch
      %66 = sbr.rel (0) target = $region29
    $region28: #{simple_model_forward.1} parent=1 // pred_region
      _
    $region29: #{simple_model_forward.1} parent=1 // pred_fallthru
      _
    %67 = vsyncpa [#allocation3], 1
    %68 = vsyncpa [#allocation5], 1

</llo_original>
